<compile_context>
chip_gen: v6e
topology: v6e:2x2x1
jax: 0.10.0
libtpu: 0.0.40
codegen_flags: <defaults>
</compile_context>

<pallas_src>
import functools

import jax
import jax.numpy as jnp
from jax.experimental import pallas as pl
from jax.experimental.pallas import tpu as pltpu


def _round_up(n: int, m: int) -> int:
    return ((n + m - 1) // m) * m


# --------------------------------------------------------------------------------------
# Kernel
# --------------------------------------------------------------------------------------
def _mlp_kernel(x_ref, w1_ref, w2_ref, w3_ref, b_ref, o_ref):
    """Fused 3-layer MLP forward for one batch tile; all operands resident in VMEM."""
    wdt = w1_ref.dtype                       # bf16 (or f32) matmul-operand dtype
    d_h = w1_ref.shape[1]                    # padded hidden width (multiple of 128)
    d_o = w3_ref.shape[1]                    # padded output width (multiple of 128)

    x = x_ref[...].astype(wdt)               # [tb, d_in]

    h = jnp.dot(x, w1_ref[...], preferred_element_type=jnp.float32)
    h = jnp.maximum(h + b_ref[0:1, :d_h], 0.0)           # f32 bias + ReLU

    h = jnp.dot(h.astype(wdt), w2_ref[...], preferred_element_type=jnp.float32)
    h = jnp.maximum(h + b_ref[1:2, :d_h], 0.0)

    out = jnp.dot(h.astype(wdt), w3_ref[...], preferred_element_type=jnp.float32)
    out = out + b_ref[2:3, :d_o]

    o_ref[...] = out.astype(o_ref.dtype)                 # lane-dense (128-wide) store


# --------------------------------------------------------------------------------------
# Parameter preparation (one-time): pad to lane-dense dims, cast to bf16, pack biases.
# --------------------------------------------------------------------------------------
def prepare_params(params, use_bf16: bool = True):
    w1, b1 = params["w1"], params["b1"]
    w2, b2 = params["w2"], params["b2"]
    w3, b3 = params["w3"], params["b3"]
    d_in, d_h = w1.shape
    d_out = w3.shape[1]
    d_h_p = _round_up(d_h, 128)
    d_out_p = _round_up(d_out, 128)
    d_max = max(d_h_p, d_out_p)
    wdt = jnp.bfloat16 if use_bf16 else jnp.float32

    w1p = jnp.zeros((d_in, d_h_p), wdt).at[:, :d_h].set(w1.astype(wdt))
    w2p = jnp.zeros((d_h_p, d_h_p), wdt).at[:d_h, :d_h].set(w2.astype(wdt))
    w3p = jnp.zeros((d_h_p, d_out_p), wdt).at[:d_h, :d_out].set(w3.astype(wdt))

    # rows 0/1/2 = b1/b2/b3 (f32); remaining rows are sublane padding
    b = jnp.zeros((8, d_max), jnp.float32)
    b = b.at[0, :d_h].set(b1.reshape(-1).astype(jnp.float32))
    b = b.at[1, :d_h].set(b2.reshape(-1).astype(jnp.float32))
    b = b.at[2, :d_out].set(b3.reshape(-1).astype(jnp.float32))

    return {"w1": w1p, "w2": w2p, "w3": w3p, "b": b}


# --------------------------------------------------------------------------------------
# Forward wrapper
# --------------------------------------------------------------------------------------
@functools.partial(jax.jit, static_argnames=("d_out",))
def mlp_forward(x, prepared, d_out):
    w1, w2, w3, b = prepared["w1"], prepared["w2"], prepared["w3"], prepared["b"]

    orig_ndim = x.ndim
    if x.ndim == 0:
        x = x.reshape(1, 1)
    elif x.ndim == 1:
        x = x[None, :]
    x = x.astype(jnp.float32)

    B, d_in = x.shape
    d_h_p = w1.shape[1]
    d_out_p = w3.shape[1]

    # Batch tiling: one big tile when it fits, else 512-row tiles.
    MAX_TILE = 512
    block_b = B if B <= MAX_TILE else MAX_TILE
    B_pad = _round_up(B, block_b)
    if B_pad != B:
        # TODO(synk): replace tail padding with a masked store on the last grid step.
        x = jnp.pad(x, ((0, B_pad - B), (0, 0)))

    grid = (B_pad // block_b,)

    # VMEM budget: resident weights + double-buffered x/out tiles + in-kernel temporaries.
    bytes_w = (w1.size + w2.size + w3.size) * w1.dtype.itemsize
    bytes_act = 2 * block_b * (d_in + d_out_p) * 4
    bytes_tmp = 4 * block_b * d_h_p * 4
    est_vmem = 2 * bytes_w + b.size * 4 + bytes_act + bytes_tmp
    ckw = dict(dimension_semantics=("parallel",))
    if est_vmem > 24 * (1 << 20):
        # raise the scoped-VMEM limit only when big tiles actually need it
        ckw["vmem_limit_bytes"] = min(int(est_vmem * 1.25), 100 * (1 << 20))

    out = pl.pallas_call(
        _mlp_kernel,
        out_shape=jax.ShapeDtypeStruct((B_pad, d_out_p), jnp.float32),
        grid_spec=pltpu.PrefetchScalarGridSpec(
            num_scalar_prefetch=0,
            grid=grid,
            in_specs=[
                pl.BlockSpec((block_b, d_in), lambda i: (i, 0)),    # x tile (streams)
                pl.BlockSpec((d_in, d_h_p), lambda i: (0, 0)),      # W1 (resident)
                pl.BlockSpec((d_h_p, d_h_p), lambda i: (0, 0)),     # W2 (resident)
                pl.BlockSpec((d_h_p, d_out_p), lambda i: (0, 0)),   # W3 (resident)
                pl.BlockSpec((8, b.shape[1]), lambda i: (0, 0)),    # packed biases (resident)
            ],
            out_specs=pl.BlockSpec((block_b, d_out_p), lambda i: (i, 0)),
        ),
        compiler_params=pltpu.CompilerParams(**ckw),
    )(x, w1, w2, w3, b)

    out = out[:B, :d_out]
    if orig_ndim <= 1:
        out = out[0]
    return out


# --------------------------------------------------------------------------------------
# Init + references
# --------------------------------------------------------------------------------------
def init_params(key, input_dim, hidden_dim, output_dim):
    """torch.nn.Linear-style U(-1/sqrt(fan_in), 1/sqrt(fan_in)); weights as [in, out]."""
    keys = jax.random.split(key, 6)

    def linear(kw, kb, fan_in, fan_out):
        bound = 1.0 / float(fan_in) ** 0.5
        w = jax.random.uniform(kw, (fan_in, fan_out), jnp.float32, -bound, bound)
        b = jax.random.uniform(kb, (1, fan_out), jnp.float32, -bound, bound)
        return w, b

    w1, b1 = linear(keys[0], keys[1], input_dim, hidden_dim)
    w2, b2 = linear(keys[2], keys[3], hidden_dim, hidden_dim)
    w3, b3 = linear(keys[4], keys[5], hidden_dim, output_dim)
    return {"w1": w1, "b1": b1, "w2": w2, "b2": b2, "w3": w3, "b3": b3}


def mlp_reference_f32(x, params):
    h = jnp.maximum(x @ params["w1"] + params["b1"], 0.0)
    h = jnp.maximum(h @ params["w2"] + params["b2"], 0.0)
    return h @ params["w3"] + params["b3"]


def mlp_reference_bf16(x, params):
    """Matches the kernel's numerics: bf16 matmul operands, f32 accumulate/bias/ReLU."""
    def lin(a, w, bb):
        return jnp.dot(a.astype(jnp.bfloat16), w.astype(jnp.bfloat16),
                       preferred_element_type=jnp.float32) + bb
    h = jnp.maximum(lin(x, params["w1"], params["b1"]), 0.0)
    h = jnp.maximum(lin(h, params["w2"], params["b2"]), 0.0)
    return lin(h, params["w3"], params["b3"])


# --------------------------------------------------------------------------------------
# Demo / self-test
# --------------------------------------------------------------------------------------
if __name__ == "__main__":
    INPUT_DIM, HIDDEN_DIM, OUTPUT_DIM = 16, 64, 4
    BATCH = 8

    key = jax.random.PRNGKey(0)
    k_params, k_x = jax.random.split(key)

    params = init_params(k_params, INPUT_DIM, HIDDEN_DIM, OUTPUT_DIM)
    x = jax.random.normal(k_x, (BATCH, INPUT_DIM), dtype=jnp.float32)

    prepared = prepare_params(params, use_bf16=True)
    out = mlp_forward(x, prepared, d_out=OUTPUT_DIM)
    out = jax.block_until_ready(out)

    ref_bf16 = mlp_reference_bf16(x, params)   # same bf16-operand numerics as the kernel
    ref_f32 = mlp_reference_f32(x, params)     # full-precision reference

    assert out.shape == (BATCH, OUTPUT_DIM), out.shape
    assert jnp.allclose(out, ref_bf16, atol=1e-3, rtol=1e-3), \
        float(jnp.abs(out - ref_bf16).max())
    assert jnp.allclose(out, ref_f32, atol=5e-2, rtol=5e-2), \
        float(jnp.abs(out - ref_f32).max())

    print("KERNEL_OK")
</pallas_src>

<mosaic_0001>
module attributes {stable_mosaic.version = 11 : i64} {
  func.func @_mlp_kernel(%arg0: i32, %arg1: memref<8x16xf32, #tpu.memory_space<vmem>>, %arg2: memref<16x128xbf16, #tpu.memory_space<vmem>>, %arg3: memref<128x128xbf16, #tpu.memory_space<vmem>>, %arg4: memref<128x128xbf16, #tpu.memory_space<vmem>>, %arg5: memref<8x128xf32, #tpu.memory_space<vmem>>, %arg6: memref<8x128xf32, #tpu.memory_space<vmem>>) attributes {dimension_semantics = [#tpu.dimension_semantics<parallel>], iteration_bounds = array<i64: 1>, scalar_prefetch = 0 : i64, scratch_operands = 0 : i64, tpu.core_type = #tpu.core_type<tc>, window_params = [{transform_indices = @transform_0, window_bounds = array<i64: 8, 16>}, {pipeline_mode = #tpu.pipeline_mode<synchronous>, transform_indices = @transform_1, window_bounds = array<i64: 16, 128>}, {pipeline_mode = #tpu.pipeline_mode<synchronous>, transform_indices = @transform_2, window_bounds = array<i64: 128, 128>}, {pipeline_mode = #tpu.pipeline_mode<synchronous>, transform_indices = @transform_3, window_bounds = array<i64: 128, 128>}, {pipeline_mode = #tpu.pipeline_mode<synchronous>, transform_indices = @transform_4, window_bounds = array<i64: 8, 128>}, {transform_indices = @transform_5, window_bounds = array<i64: 8, 128>}]} {
    %c0 = arith.constant 0 : index
    %c0_0 = arith.constant 0 : index
    %0 = vector.load %arg1[%c0, %c0_0] : memref<8x16xf32, #tpu.memory_space<vmem>>, vector<8x16xf32>
    %1 = arith.truncf %0 : vector<8x16xf32> to vector<8x16xbf16>
    %c0_1 = arith.constant 0 : index
    %c0_2 = arith.constant 0 : index
    %2 = vector.load %arg2[%c0_1, %c0_2] : memref<16x128xbf16, #tpu.memory_space<vmem>>, vector<16x128xbf16>
    %cst = arith.constant dense<0.000000e+00> : vector<8x128xf32>
    %3 = tpu.matmul %1, %2, %cst {dimension_numbers = #tpu.dot_dimension_numbers<[1], [0], [0], [1], [0, 0, 1, 1], [], []>} : vector<8x16xbf16>, vector<16x128xbf16>, vector<8x128xf32> -> vector<8x128xf32>
    %c0_3 = arith.constant 0 : index
    %c0_4 = arith.constant 0 : index
    %4 = vector.load %arg5[%c0_3, %c0_4] : memref<8x128xf32, #tpu.memory_space<vmem>>, vector<1x128xf32>
    %5 = vector.broadcast %4 : vector<1x128xf32> to vector<8x128xf32>
    %6 = arith.addf %3, %5 : vector<8x128xf32>
    %cst_5 = arith.constant 0.000000e+00 : f32
    %7 = vector.broadcast %cst_5 : f32 to vector<8x128xf32>
    %8 = arith.maximumf %6, %7 : vector<8x128xf32>
    %9 = arith.truncf %8 : vector<8x128xf32> to vector<8x128xbf16>
    %c0_6 = arith.constant 0 : index
    %c0_7 = arith.constant 0 : index
    %10 = vector.load %arg3[%c0_6, %c0_7] : memref<128x128xbf16, #tpu.memory_space<vmem>>, vector<128x128xbf16>
    %cst_8 = arith.constant dense<0.000000e+00> : vector<8x128xf32>
    %11 = tpu.matmul %9, %10, %cst_8 {dimension_numbers = #tpu.dot_dimension_numbers<[1], [0], [0], [1], [0, 0, 1, 1], [], []>} : vector<8x128xbf16>, vector<128x128xbf16>, vector<8x128xf32> -> vector<8x128xf32>
    %c1 = arith.constant 1 : index
    %c0_9 = arith.constant 0 : index
    %12 = vector.load %arg5[%c1, %c0_9] : memref<8x128xf32, #tpu.memory_space<vmem>>, vector<1x128xf32>
    %13 = vector.broadcast %12 : vector<1x128xf32> to vector<8x128xf32>
    %14 = arith.addf %11, %13 : vector<8x128xf32>
    %cst_10 = arith.constant 0.000000e+00 : f32
    %15 = vector.broadcast %cst_10 : f32 to vector<8x128xf32>
    %16 = arith.maximumf %14, %15 : vector<8x128xf32>
    %17 = arith.truncf %16 : vector<8x128xf32> to vector<8x128xbf16>
    %c0_11 = arith.constant 0 : index
    %c0_12 = arith.constant 0 : index
    %18 = vector.load %arg4[%c0_11, %c0_12] : memref<128x128xbf16, #tpu.memory_space<vmem>>, vector<128x128xbf16>
    %cst_13 = arith.constant dense<0.000000e+00> : vector<8x128xf32>
    %19 = tpu.matmul %17, %18, %cst_13 {dimension_numbers = #tpu.dot_dimension_numbers<[1], [0], [0], [1], [0, 0, 1, 1], [], []>} : vector<8x128xbf16>, vector<128x128xbf16>, vector<8x128xf32> -> vector<8x128xf32>
    %c2 = arith.constant 2 : index
    %c0_14 = arith.constant 0 : index
    %20 = vector.load %arg5[%c2, %c0_14] : memref<8x128xf32, #tpu.memory_space<vmem>>, vector<1x128xf32>
    %21 = vector.broadcast %20 : vector<1x128xf32> to vector<8x128xf32>
    %22 = arith.addf %19, %21 : vector<8x128xf32>
    %c0_15 = arith.constant 0 : index
    %c0_16 = arith.constant 0 : index
    %23 = vector.load %arg6[%c0_15, %c0_16] : memref<8x128xf32, #tpu.memory_space<vmem>>, vector<8x128xf32>
    tpu.vector_store %arg6[%c0_15, %c0_16], %22 {strides = array<i32>} : memref<8x128xf32, #tpu.memory_space<vmem>>, vector<8x128xf32>,
    return
  }
  func.func @transform_0(%arg0: i32) -> (i32, i32) {
    %c0_i32 = arith.constant 0 : i32
    %c0_i32_0 = arith.constant 0 : i32
    return %arg0, %c0_i32 : i32, i32
  }
  func.func @transform_1(%arg0: i32) -> (i32, i32) {
    %c0_i32 = arith.constant 0 : i32
    %c0_i32_0 = arith.constant 0 : i32
    %c0_i32_1 = arith.constant 0 : i32
    return %c0_i32, %c0_i32_0 : i32, i32
  }
  func.func @transform_2(%arg0: i32) -> (i32, i32) {
    %c0_i32 = arith.constant 0 : i32
    %c0_i32_0 = arith.constant 0 : i32
    %c0_i32_1 = arith.constant 0 : i32
    return %c0_i32, %c0_i32_0 : i32, i32
  }
  func.func @transform_3(%arg0: i32) -> (i32, i32) {
    %c0_i32 = arith.constant 0 : i32
    %c0_i32_0 = arith.constant 0 : i32
    %c0_i32_1 = arith.constant 0 : i32
    return %c0_i32, %c0_i32_0 : i32, i32
  }
  func.func @transform_4(%arg0: i32) -> (i32, i32) {
    %c0_i32 = arith.constant 0 : i32
    %c0_i32_0 = arith.constant 0 : i32
    %c0_i32_1 = arith.constant 0 : i32
    return %c0_i32, %c0_i32_0 : i32, i32
  }
  func.func @transform_5(%arg0: i32) -> (i32, i32) {
    %c0_i32 = arith.constant 0 : i32
    %c0_i32_0 = arith.constant 0 : i32
    return %arg0, %c0_i32 : i32, i32
  }
}

</mosaic_0001>

<llo_original>
// kernel: mlp_forward.1
$region0: #{mlp_forward.1}
  #allocation0 [shape = 'u32[]', space=smem, size = 0x4, offset = 0x4, fixed_abs, tag = 'smem constant byte address 0x4 - core index']
  #allocation1 [shape = 'u32[144,128]{1,0:T(1,128)}', space=vmem, size = 0x12000, scoped, tag = 'internal scratch']
  %s0 = inlined_call_operand.hbm [shape: f32[8,16], index: 0, kind: input, shape index: {}]
  %s1 = inlined_call_operand.hbm [shape: bf16[16,128], index: 1, kind: input, shape index: {}]
  %s2 = inlined_call_operand.hbm [shape: bf16[128,128], index: 2, kind: input, shape index: {}]
  %s3 = inlined_call_operand.hbm [shape: bf16[128,128], index: 3, kind: input, shape index: {}]
  %s4 = inlined_call_operand.hbm [shape: f32[8,128], index: 4, kind: input, shape index: {}]
  %s5 = inlined_call_operand.vmem [shape: f32[8,128], index: 5, kind: output, shape index: {}]
  %s6 = sld [smem:[#allocation0]]
  $region50: #{mlp_forward.1} parent=0
    _
  %s8 = ssub.s32 1, %s6
  %s9 = scalar_select 0, %s8, %s6
  $region1: #{mlp_forward.1} parent=0
    #allocation2 [shape = 'u8[4096]{0}', space=vmem, size = 0x1000, scoped, tag = 'input window, operand 0, single buffered']
    #allocation3 [shape = 's32[1]{0}', space=sflag, size = 0x4, scoped, tag = 'scoped memory for mlp_forward.1']
    #allocation4 [shape = 'u8[4096]{0}', space=vmem, size = 0x1000, scoped, tag = 'input window, operand 1, single buffered']
    #allocation5 [shape = 's32[1]{0}', space=sflag, size = 0x4, scoped, tag = 'scoped memory for mlp_forward.1']
    #allocation6 [shape = 'u8[32768]{0}', space=vmem, size = 0x8000, scoped, tag = 'input window, operand 2, single buffered']
    #allocation7 [shape = 'u8[32768]{0}', space=vmem, size = 0x8000, scoped, tag = 'input window, operand 3, single buffered']
    #allocation8 [shape = 's32[1]{0}', space=sflag, size = 0x4, scoped, tag = 'scoped memory for mlp_forward.1']
    #allocation9 [shape = 'u8[4096]{0}', space=vmem, size = 0x1000, scoped, tag = 'input window, operand 4, single buffered']
    %10 = vsyncpa [#allocation3], 0
    %11 = vsyncpa [#allocation5], 0
    %12 = vsyncpa [#allocation8], 0
    // Predicated region
    $region2: #{mlp_forward.1} parent=1 // pred_check
      _
    $region3: #{mlp_forward.1} parent=1 // pred_check_branch
      %14 = sbr.rel (0) target = $region5
    $region4: #{mlp_forward.1} parent=1 // pred_region
      %s16 = ssub.s32 128, 128
      %17 = vsyncadd [#allocation3], %s16
      %s19 = sshll.u32 [#allocation2], 4
      %s20 = int_to_ptr.vmem [resolvable:$true] %s19
      %22 = dma.hbm_to_vmem [thread:$0]  %s0, 128, %s20, [#allocation3]
    $region5: #{mlp_forward.1} parent=1 // pred_fallthru
      _
    // Predicated region
    $region6: #{mlp_forward.1} parent=1 // pred_check
      _
    $region7: #{mlp_forward.1} parent=1 // pred_check_branch
      %24 = sbr.rel (0) target = $region9
    $region8: #{mlp_forward.1} parent=1 // pred_region
      %s26 = ssub.s32 128, 128
      %27 = vsyncadd [#allocation5], %s26
      %s28 = sshll.u32 [#allocation4], 4
      %s29 = int_to_ptr.vmem [resolvable:$true] %s28
      %34 = dma.hbm_to_vmem [thread:$0]  %s1, 128, %s29, [#allocation5], 64, 64, 4
    $region9: #{mlp_forward.1} parent=1 // pred_fallthru
      _
    // Predicated region
    $region10: #{mlp_forward.1} parent=1 // pred_check
      _
    $region11: #{mlp_forward.1} parent=1 // pred_check_branch
      %36 = sbr.rel (0) target = $region13
    $region12: #{mlp_forward.1} parent=1 // pred_region
      %s38 = ssub.s32 1024, 1024
      %39 = vsyncadd [#allocation5], %s38
      %s40 = sshll.u32 [#allocation6], 4
      %s41 = int_to_ptr.vmem [resolvable:$true] %s40
      %46 = dma.hbm_to_vmem [thread:$0]  %s2, 1024, %s41, [#allocation5], 64, 64, 4
    $region13: #{mlp_forward.1} parent=1 // pred_fallthru
      _
    // Predicated region
    $region14: #{mlp_forward.1} parent=1 // pred_check
      _
    $region15: #{mlp_forward.1} parent=1 // pred_check_branch
      %48 = sbr.rel (0) target = $region17
    $region16: #{mlp_forward.1} parent=1 // pred_region
      %s50 = ssub.s32 1024, 1024
      %51 = vsyncadd [#allocation8], %s50
      %s52 = sshll.u32 [#allocation7], 4
      %s53 = int_to_ptr.vmem [resolvable:$true] %s52
      %58 = dma.hbm_to_vmem [thread:$0]  %s3, 1024, %s53, [#allocation8], 64, 64, 4
    $region17: #{mlp_forward.1} parent=1 // pred_fallthru
      _
    // Predicated region
    $region18: #{mlp_forward.1} parent=1 // pred_check
      _
    $region19: #{mlp_forward.1} parent=1 // pred_check_branch
      %60 = sbr.rel (0) target = $region21
    $region20: #{mlp_forward.1} parent=1 // pred_region
      %s62 = ssub.s32 128, 128
      %63 = vsyncadd [#allocation8], %s62
      %s65 = sshll.u32 [#allocation9], 4
      %s66 = int_to_ptr.vmem [resolvable:$true] %s65
      %68 = dma.hbm_to_vmem [thread:$0]  %s4, 128, %s66, [#allocation8]
    $region21: #{mlp_forward.1} parent=1 // pred_fallthru
      _
    // Predicated region
    $region22: #{mlp_forward.1} parent=1 // pred_check
      _
    $region23: #{mlp_forward.1} parent=1 // pred_check_branch
      %70 = sbr.rel (0) target = $region25
    $region24: #{mlp_forward.1} parent=1 // pred_region
      %71 = dma.done [#allocation3], 128
    $region25: #{mlp_forward.1} parent=1 // pred_fallthru
      _
    // Predicated region
    $region26: #{mlp_forward.1} parent=1 // pred_check
      _
    $region27: #{mlp_forward.1} parent=1 // pred_check_branch
      %73 = sbr.rel (0) target = $region29
    $region28: #{mlp_forward.1} parent=1 // pred_region
      %74 = dma.done [#allocation5], 128
    $region29: #{mlp_forward.1} parent=1 // pred_fallthru
      _
    // Predicated region
    $region30: #{mlp_forward.1} parent=1 // pred_check
      _
    $region31: #{mlp_forward.1} parent=1 // pred_check_branch
      %76 = sbr.rel (0) target = $region33
    $region32: #{mlp_forward.1} parent=1 // pred_region
      %77 = dma.done [#allocation5], 1024
    $region33: #{mlp_forward.1} parent=1 // pred_fallthru
      _
    // Predicated region
    $region34: #{mlp_forward.1} parent=1 // pred_check
      _
    $region35: #{mlp_forward.1} parent=1 // pred_check_branch
      %79 = sbr.rel (0) target = $region37
    $region36: #{mlp_forward.1} parent=1 // pred_region
      %80 = dma.done [#allocation8], 1024
    $region37: #{mlp_forward.1} parent=1 // pred_fallthru
      _
    // Predicated region
    $region38: #{mlp_forward.1} parent=1 // pred_check
      _
    $region39: #{mlp_forward.1} parent=1 // pred_check_branch
      %82 = sbr.rel (0) target = $region41
    $region40: #{mlp_forward.1} parent=1 // pred_region
      %83 = dma.done [#allocation8], 128
    $region41: #{mlp_forward.1} parent=1 // pred_fallthru
      _
    %v85 = vld [vmem:[#allocation2] sm:$0xff]
    %v86 = vpack.c.bf16 %v85, %v85
    %v87 = vld [vmem:[#allocation4] sm:$0xf]
    %v88 = vld [vmem:[#allocation4 + $0x4] sm:$0xf]
    %v89 = vld [vmem:[#allocation9] sm:$0x1]
    %v90 = vlaneseq
    %v91 = vshrl.u32 %v90, 7
    %v92 = vsub.s32 0, %v91
    %v93 = vrot.slane %v89, %v92
    %v96 = vunpack.c.l.b16 %v87
    %v97 = vunpack.c.l.b16 %v88
    %v98 = vpack.c.b16 %v97, %v96
    %vm100 = vcmask 130048
    %v102 = vsel %vm100, %v86, 0
    %104 = vmatprep.subr.bf16.mxu0 0
    %105 = vmatpush1.bf16.msra.mxu0 0
    %106 = vmatprep.subr.bf16.mxu0 0
    %107 = vmatpush1.bf16.msra.mxu0 0
    %108 = vmatprep.subr.bf16.mxu0 0
    %109 = vmatpush1.bf16.msra.mxu0 0
    %110 = vmatprep.subr.bf16.mxu0 0
    %111 = vmatpush1.bf16.msra.mxu0 0
    %112 = vmatprep.subr.bf16.mxu0 0
    %113 = vmatpush1.bf16.msra.mxu0 0
    %114 = vmatprep.subr.bf16.mxu0 0
    %115 = vmatpush1.bf16.msra.mxu0 0
    %116 = vmatprep.subr.bf16.mxu0 0
    %117 = vmatpush1.bf16.msra.mxu0 0
    %118 = vmatprep.subr.bf16.mxu0 0
    %119 = vmatpush1.bf16.msra.mxu0 %v98
    %120 = vmatprep.subr.bf16.mxu0 0
    %121 = vmatpush2.bf16.msra.mxu0 0
    %122 = vmatprep.subr.bf16.mxu0 0
    %123 = vmatpush2.bf16.msra.mxu0 0
    %124 = vmatprep.subr.bf16.mxu0 0
    %125 = vmatpush2.bf16.msra.mxu0 0
    %126 = vmatprep.subr.bf16.mxu0 0
    %127 = vmatpush2.bf16.msra.mxu0 0
    %128 = vmatprep.subr.bf16.mxu0 0
    %129 = vmatpush2.bf16.msra.mxu0 0
    %130 = vmatprep.subr.bf16.mxu0 0
    %131 = vmatpush2.bf16.msra.mxu0 0
    %132 = vmatprep.subr.bf16.mxu0 0
    %133 = vmatpush2.bf16.msra.mxu0 0
    %134 = vmatprep.subr.bf16.mxu0 0
    %135 = vmatpush2.bf16.msra.mxu0 0
    %136 = vmatprep.mubr.bf16.mxu0 0
    %137 = vmatmul.mubr.bf16.gmra.mxu0 %v102
    %v138 = vpop.f32.mrf.mxu0
    %v139 = vadd.f32 %v93, %v138
    %v140 = vpop.f32.mrf.mxu0
    %v141 = vpop.f32.mrf.mxu0
    %v142 = vpop.f32.mrf.mxu0
    %143 = vdwg.mxu0
    %v144 = vmax.f32 %v139, 0.0
    %v145 = vpack.c.bf16 %v144, %v144
    %v146 = vld [vmem:[#allocation6] sm:$0xf]
    %v147 = vld [vmem:[#allocation6 + $0x4] sm:$0xf]
    %v148 = vld [vmem:[#allocation6 + $0x8] sm:$0xf]
    %v149 = vld [vmem:[#allocation6 + $0xc] sm:$0xf]
    %v150 = vld [vmem:[#allocation6 + $0x10] sm:$0xf]
    %v151 = vld [vmem:[#allocation6 + $0x14] sm:$0xf]
    %v152 = vld [vmem:[#allocation6 + $0x18] sm:$0xf]
    %v153 = vld [vmem:[#allocation6 + $0x1c] sm:$0xf]
    %v154 = vld [vmem:[#allocation6 + $0x20] sm:$0xf]
    %v155 = vld [vmem:[#allocation6 + $0x24] sm:$0xf]
    %v156 = vld [vmem:[#allocation6 + $0x28] sm:$0xf]
    %v157 = vld [vmem:[#allocation6 + $0x2c] sm:$0xf]
    %v158 = vld [vmem:[#allocation6 + $0x30] sm:$0xf]
    %v159 = vld [vmem:[#allocation6 + $0x34] sm:$0xf]
    %v160 = vld [vmem:[#allocation6 + $0x38] sm:$0xf]
    %v161 = vld [vmem:[#allocation6 + $0x3c] sm:$0xf]
    %v162 = vld [vmem:[#allocation9 + $0x1] sm:$0x1]
    %v163 = vlaneseq
    %v164 = vshrl.u32 %v163, 7
    %v165 = vsub.s32 0, %v164
    %v166 = vrot.slane %v162, %v165
    %v183 = vunpack.c.l.b16 %v146
    %v184 = vunpack.c.l.b16 %v147
    %v185 = vunpack.c.l.b16 %v148
    %v186 = vunpack.c.l.b16 %v149
    %v187 = vunpack.c.l.b16 %v150
    %v188 = vunpack.c.l.b16 %v151
    %v189 = vunpack.c.l.b16 %v152
    %v190 = vunpack.c.l.b16 %v153
    %v191 = vunpack.c.l.b16 %v154
    %v192 = vunpack.c.l.b16 %v155
    %v193 = vunpack.c.l.b16 %v156
    %v194 = vunpack.c.l.b16 %v157
    %v195 = vunpack.c.l.b16 %v158
    %v196 = vunpack.c.l.b16 %v159
    %v197 = vunpack.c.l.b16 %v160
    %v198 = vunpack.c.l.b16 %v161
    %v199 = vpack.c.b16 %v184, %v183
    %v200 = vpack.c.b16 %v186, %v185
    %v201 = vpack.c.b16 %v188, %v187
    %v202 = vpack.c.b16 %v190, %v189
    %v203 = vpack.c.b16 %v192, %v191
    %v204 = vpack.c.b16 %v194, %v193
    %v205 = vpack.c.b16 %v196, %v195
    %v206 = vpack.c.b16 %v198, %v197
    %215 = vmatprep.subr.bf16.mxu0 0
    %216 = vmatpush1.bf16.msra.mxu0 %v206
    %217 = vmatprep.subr.bf16.mxu0 0
    %218 = vmatpush1.bf16.msra.mxu0 %v205
    %219 = vmatprep.subr.bf16.mxu0 0
    %220 = vmatpush1.bf16.msra.mxu0 %v204
    %221 = vmatprep.subr.bf16.mxu0 0
    %222 = vmatpush1.bf16.msra.mxu0 %v203
    %223 = vmatprep.subr.bf16.mxu0 0
    %224 = vmatpush1.bf16.msra.mxu0 %v202
    %225 = vmatprep.subr.bf16.mxu0 0
    %226 = vmatpush1.bf16.msra.mxu0 %v201
    %227 = vmatprep.subr.bf16.mxu0 0
    %228 = vmatpush1.bf16.msra.mxu0 %v200
    %229 = vmatprep.subr.bf16.mxu0 0
    %230 = vmatpush1.bf16.msra.mxu0 %v199
    %231 = vmatprep.subr.bf16.mxu0 0
    %232 = vmatpush2.bf16.msra.mxu0 0
    %233 = vmatprep.subr.bf16.mxu0 0
    %234 = vmatpush2.bf16.msra.mxu0 0
    %235 = vmatprep.subr.bf16.mxu0 0
    %236 = vmatpush2.bf16.msra.mxu0 0
    %237 = vmatprep.subr.bf16.mxu0 0
    %238 = vmatpush2.bf16.msra.mxu0 0
    %239 = vmatprep.subr.bf16.mxu0 0
    %240 = vmatpush2.bf16.msra.mxu0 0
    %241 = vmatprep.subr.bf16.mxu0 0
    %242 = vmatpush2.bf16.msra.mxu0 0
    %243 = vmatprep.subr.bf16.mxu0 0
    %244 = vmatpush2.bf16.msra.mxu0 0
    %245 = vmatprep.subr.bf16.mxu0 0
    %246 = vmatpush2.bf16.msra.mxu0 0
    %247 = vmatprep.mubr.bf16.mxu0 0
    %248 = vmatmul.mubr.bf16.gmra.mxu0 %v145
    %v249 = vpop.f32.mrf.mxu0
    %v250 = vadd.f32 %v166, %v249
    %v251 = vpop.f32.mrf.mxu0
    %v252 = vpop.f32.mrf.mxu0
    %v253 = vpop.f32.mrf.mxu0
    %254 = vdwg.mxu0
    %v255 = vmax.f32 %v250, 0.0
    %v256 = vpack.c.bf16 %v255, %v255
    %v257 = vld [vmem:[#allocation7] sm:$0xf]
    %v258 = vld [vmem:[#allocation7 + $0x4] sm:$0xf]
    %v259 = vld [vmem:[#allocation7 + $0x8] sm:$0xf]
    %v260 = vld [vmem:[#allocation7 + $0xc] sm:$0xf]
    %v261 = vld [vmem:[#allocation7 + $0x10] sm:$0xf]
    %v262 = vld [vmem:[#allocation7 + $0x14] sm:$0xf]
    %v263 = vld [vmem:[#allocation7 + $0x18] sm:$0xf]
    %v264 = vld [vmem:[#allocation7 + $0x1c] sm:$0xf]
    %v265 = vld [vmem:[#allocation7 + $0x20] sm:$0xf]
    %v266 = vld [vmem:[#allocation7 + $0x24] sm:$0xf]
    %v267 = vld [vmem:[#allocation7 + $0x28] sm:$0xf]
    %v268 = vld [vmem:[#allocation7 + $0x2c] sm:$0xf]
    %v269 = vld [vmem:[#allocation7 + $0x30] sm:$0xf]
    %v270 = vld [vmem:[#allocation7 + $0x34] sm:$0xf]
    %v271 = vld [vmem:[#allocation7 + $0x38] sm:$0xf]
    %v272 = vld [vmem:[#allocation7 + $0x3c] sm:$0xf]
    %v273 = vld [vmem:[#allocation9 + $0x2] sm:$0x1]
    %v274 = vlaneseq
    %v275 = vshrl.u32 %v274, 7
    %v276 = vsub.s32 0, %v275
    %v277 = vrot.slane %v273, %v276
    %v294 = vunpack.c.l.b16 %v257
    %v295 = vunpack.c.l.b16 %v258
    %v296 = vunpack.c.l.b16 %v259
    %v297 = vunpack.c.l.b16 %v260
    %v298 = vunpack.c.l.b16 %v261
    %v299 = vunpack.c.l.b16 %v262
    %v300 = vunpack.c.l.b16 %v263
    %v301 = vunpack.c.l.b16 %v264
    %v302 = vunpack.c.l.b16 %v265
    %v303 = vunpack.c.l.b16 %v266
    %v304 = vunpack.c.l.b16 %v267
    %v305 = vunpack.c.l.b16 %v268
    %v306 = vunpack.c.l.b16 %v269
    %v307 = vunpack.c.l.b16 %v270
    %v308 = vunpack.c.l.b16 %v271
    %v309 = vunpack.c.l.b16 %v272
    %v310 = vpack.c.b16 %v295, %v294
    %v311 = vpack.c.b16 %v297, %v296
    %v312 = vpack.c.b16 %v299, %v298
    %v313 = vpack.c.b16 %v301, %v300
    %v314 = vpack.c.b16 %v303, %v302
    %v315 = vpack.c.b16 %v305, %v304
    %v316 = vpack.c.b16 %v307, %v306
    %v317 = vpack.c.b16 %v309, %v308
    %326 = vmatprep.subr.bf16.mxu0 0
    %327 = vmatpush1.bf16.msra.mxu0 %v317
    %328 = vmatprep.subr.bf16.mxu0 0
    %329 = vmatpush1.bf16.msra.mxu0 %v316
    %330 = vmatprep.subr.bf16.mxu0 0
    %331 = vmatpush1.bf16.msra.mxu0 %v315
    %332 = vmatprep.subr.bf16.mxu0 0
    %333 = vmatpush1.bf16.msra.mxu0 %v314
    %334 = vmatprep.subr.bf16.mxu0 0
    %335 = vmatpush1.bf16.msra.mxu0 %v313
    %336 = vmatprep.subr.bf16.mxu0 0
    %337 = vmatpush1.bf16.msra.mxu0 %v312
    %338 = vmatprep.subr.bf16.mxu0 0
    %339 = vmatpush1.bf16.msra.mxu0 %v311
    %340 = vmatprep.subr.bf16.mxu0 0
    %341 = vmatpush1.bf16.msra.mxu0 %v310
    %342 = vmatprep.subr.bf16.mxu0 0
    %343 = vmatpush2.bf16.msra.mxu0 0
    %344 = vmatprep.subr.bf16.mxu0 0
    %345 = vmatpush2.bf16.msra.mxu0 0
    %346 = vmatprep.subr.bf16.mxu0 0
    %347 = vmatpush2.bf16.msra.mxu0 0
    %348 = vmatprep.subr.bf16.mxu0 0
    %349 = vmatpush2.bf16.msra.mxu0 0
    %350 = vmatprep.subr.bf16.mxu0 0
    %351 = vmatpush2.bf16.msra.mxu0 0
    %352 = vmatprep.subr.bf16.mxu0 0
    %353 = vmatpush2.bf16.msra.mxu0 0
    %354 = vmatprep.subr.bf16.mxu0 0
    %355 = vmatpush2.bf16.msra.mxu0 0
    %356 = vmatprep.subr.bf16.mxu0 0
    %357 = vmatpush2.bf16.msra.mxu0 0
    %358 = vmatprep.mubr.bf16.mxu0 0
    %359 = vmatmul.mubr.bf16.gmra.mxu0 %v256
    %v360 = vpop.f32.mrf.mxu0
    %v361 = vadd.f32 %v277, %v360
    %v362 = vpop.f32.mrf.mxu0
    %v363 = vpop.f32.mrf.mxu0
    %v364 = vpop.f32.mrf.mxu0
    %365 = vdwg.mxu0
    %366 = vst [vmem:[%s5] sm:$0xff] %v361
    // Predicated region
    $region42: #{mlp_forward.1} parent=1 // pred_check
      _
    $region43: #{mlp_forward.1} parent=1 // pred_check_branch
      %368 = sbr.rel (0) target = $region45
    $region44: #{mlp_forward.1} parent=1 // pred_region
      _
    $region45: #{mlp_forward.1} parent=1 // pred_fallthru
      _
    // Predicated region
    $region46: #{mlp_forward.1} parent=1 // pred_check
      _
    $region47: #{mlp_forward.1} parent=1 // pred_check_branch
      %370 = sbr.rel (0) target = $region49
    $region48: #{mlp_forward.1} parent=1 // pred_region
      _
    $region49: #{mlp_forward.1} parent=1 // pred_fallthru
      _
    %371 = vsyncpa [#allocation3], 1
    %372 = vsyncpa [#allocation5], 1
    %373 = vsyncpa [#allocation8], 1

</llo_original>
